<compile_context>
chip_gen: v7x
topology: tpu7x:2x2x1
jax: 0.10.0
libtpu: 0.0.40
codegen_flags: <defaults>
</compile_context>

<pallas_src>
import functools

import jax
import jax.numpy as jnp
from jax.experimental import pallas as pl
from jax.experimental.pallas import tpu as pltpu


# ----------------------------------------------------------------------------
# Spectral normalization (one power iteration, PyTorch training semantics)
# ----------------------------------------------------------------------------
def _normalize(v, eps=1e-12):
    # PyTorch F.normalize: v / max(||v||, eps)
    return v / jnp.maximum(jnp.linalg.norm(v), eps)


def spectral_norm_weight(w, u, eps=1e-12):
    """w: (Cout, Cin, kH, kW), u: (Cout,). Returns (w_bar, u_new)."""
    O = w.shape[0]
    w_mat = w.reshape(O, -1)                  # (O, K)
    v = _normalize(w_mat.T @ u, eps)          # (K,)
    u_new = _normalize(w_mat @ v, eps)        # (O,)
    sigma = u_new @ (w_mat @ v)
    return w / sigma, u_new


# ----------------------------------------------------------------------------
# Pallas kernel: fused im2col + GEMM on the flattened padded plane.
#
# Per sample:  y_flat[o, s] = sum_{kh,kw,c} w[o,c,kh,kw] * x_flat[c, s + kh*Wp + kw]
# for s in [0, Ho*Wp); the Wp-Wo garbage columns per row are cropped in the
# wrapper. All patch windows are read straight out of the VMEM-resident input
# block — no col tensor in HBM.
# ----------------------------------------------------------------------------
def _fused_conv_kernel(w_ref, x_ref, o_ref, *, Bn, Cin, kH, kW, Wp, S_out):
    # w_ref: (kH*kW, Cout, Cin) bf16   (constant across the grid; fetched once)
    # x_ref: (Bn, Cin, Sp)      bf16   flattened padded planes for Bn samples
    # o_ref: (Bn, Cout, S_out)  f32
    for b in range(Bn):                      # static unroll; Bn is small
        acc = None
        for kh in range(kH):
            for kw in range(kW):
                off = kh * Wp + kw           # static lane offset of this tap
                piece = x_ref[b, :, pl.ds(off, S_out)]          # (Cin, S_out) bf16
                part = jnp.dot(w_ref[kh * kW + kw], piece,
                               preferred_element_type=jnp.float32)  # (Cout, S_out) f32
                acc = part if acc is None else acc + part
        o_ref[b] = acc


def conv2d_sn_fused(w9, x_flat, *, Wp, Ho, kH, kW, samples_per_step=None):
    """w9: (kH*kW, Cout, Cin) bf16, x_flat: (N, Cin, Sp) bf16.

    Returns (N, Cout, Ho*Wp) f32 — conv output on the padded-plane lane layout.
    """
    KK, Cout, Cin = w9.shape
    N, Cin2, Sp = x_flat.shape
    assert KK == kH * kW and Cin2 == Cin
    S_out = Ho * Wp
    assert Sp >= (kH - 1) * Wp + (kW - 1) + S_out, "input plane not padded enough"

    if samples_per_step is None:
        # Keep >=2 grid steps so both v7x TensorCores get work; batch the rest.
        samples_per_step = max(1, N // 2)
    if N % samples_per_step != 0:
        samples_per_step = 1
    Bn = samples_per_step
    grid = (N // Bn,)

    kernel = functools.partial(_fused_conv_kernel, Bn=Bn, Cin=Cin, kH=kH, kW=kW,
                               Wp=Wp, S_out=S_out)

    flops = 2 * N * Cout * (KK * Cin) * S_out
    bytes_accessed = w9.size * 2 + x_flat.size * 2 + N * Cout * S_out * 4

    return pl.pallas_call(
        kernel,
        out_shape=jax.ShapeDtypeStruct((N, Cout, S_out), jnp.float32),
        grid_spec=pltpu.PrefetchScalarGridSpec(
            num_scalar_prefetch=0,
            grid=grid,
            in_specs=[
                # Constant block: same block index every step -> DMA'd once.
                pl.BlockSpec((KK, Cout, Cin), lambda g: (0, 0, 0)),
                pl.BlockSpec((Bn, Cin, Sp), lambda g: (g, 0, 0)),
            ],
            out_specs=pl.BlockSpec((Bn, Cout, S_out), lambda g: (g, 0, 0)),
        ),
        compiler_params=pltpu.CompilerParams(
            dimension_semantics=("parallel",),
        ),
        cost_estimate=pl.CostEstimate(
            flops=flops, transcendentals=0, bytes_accessed=bytes_accessed
        ),
    )(w9, x_flat)


# ----------------------------------------------------------------------------
# Forward: Identity (norm='no') -> spectral-norm Conv2d (bias=False, stride=1)
# ----------------------------------------------------------------------------
def base_model_forward(x, w, u, *, padding=1):
    """x: (N, Cin, H, W) NCHW, w: (Cout, Cin, kH, kW), u: (Cout,).

    Returns (y, u_new):
      y:     (N, Cout, H_out, W_out) NCHW, float32
      u_new: updated spectral-norm power-iteration buffer (caller owns state).
    """
    # Identity norm layer (norm_layer_type='no')
    x = x

    w_bar, u_new = spectral_norm_weight(w, u)
    Cout, Cin, kH, kW = w.shape
    N, _, H, W = x.shape
    Hp, Wp = H + 2 * padding, W + 2 * padding
    Ho, Wo = Hp - kH + 1, Wp - kW + 1

    # Extra bottom rows so every shifted window of length Ho*Wp stays in bounds.
    extra_rows = -(-(kW - 1) // Wp) if kW > 1 else 0

    # Cast to bf16 BEFORE padding (single small pass; halves wrapper HBM bytes).
    xb = x.astype(jnp.bfloat16)
    xb = jnp.pad(xb, ((0, 0), (0, 0),
                      (padding, padding + extra_rows), (padding, padding)))
    x_flat = xb.reshape(N, Cin, (Hp + extra_rows) * Wp)      # free reshape

    # Weight taps ordered (kh, kw) major to match the shifted windows.
    w9 = jnp.transpose(w_bar, (2, 3, 0, 1)).reshape(kH * kW, Cout, Cin)
    w9 = w9.astype(jnp.bfloat16)

    out = conv2d_sn_fused(w9, x_flat, Wp=Wp, Ho=Ho, kH=kH, kW=kW)  # (N,Cout,Ho*Wp)

    # Padded-plane lane layout -> NCHW: reshape (free) + crop the Wp-Wo pad cols.
    y = out.reshape(N, Cout, Ho, Wp)[:, :, :, :Wo]
    return y, u_new


# ----------------------------------------------------------------------------
# Driver
# ----------------------------------------------------------------------------
if __name__ == "__main__":
    key = jax.random.PRNGKey(0)
    kx, kw_, ku = jax.random.split(key, 3)

    N, Cin, H, W = 2, 4, 16, 16
    Cout, kH, kW = 8, 3, 3
    padding = 1

    x = jax.random.normal(kx, (N, Cin, H, W), dtype=jnp.float32)
    w = jax.random.normal(kw_, (Cout, Cin, kH, kW), dtype=jnp.float32) * 0.1
    u = jax.random.normal(ku, (Cout,), dtype=jnp.float32)   # spectral_norm's u

    fwd = jax.jit(base_model_forward, static_argnames=("padding",))
    y, u_new = fwd(x, w, u, padding=padding)
    y = jax.block_until_ready(y)

    # Reference: same spectral-norm weight, XLA conv with the same bf16 operand
    # rounding and f32 accumulation (apples-to-apples with the kernel).
    w_bar, _ = spectral_norm_weight(w, u)
    y_ref = jax.lax.conv_general_dilated(
        x.astype(jnp.bfloat16), w_bar.astype(jnp.bfloat16),
        window_strides=(1, 1),
        padding=[(padding, padding), (padding, padding)],
        dimension_numbers=("NCHW", "OIHW", "NCHW"),
        preferred_element_type=jnp.float32,
    )
    assert y.shape == (N, Cout, H, W), y.shape
    assert jnp.allclose(y, y_ref, atol=2e-3, rtol=2e-3)

    print("KERNEL_OK")
</pallas_src>

<mosaic_0001>
module attributes {stable_mosaic.version = 11 : i64} {
  func.func @_fused_conv_kernel(%arg0: i32, %arg1: memref<9x8x4xbf16, #tpu.memory_space<vmem>>, %arg2: memref<1x4x342xbf16, #tpu.memory_space<vmem>>, %arg3: memref<1x8x288xf32, #tpu.memory_space<vmem>>) attributes {dimension_semantics = [#tpu.dimension_semantics<parallel>], iteration_bounds = array<i64: 2>, scalar_prefetch = 0 : i64, scratch_operands = 0 : i64, tpu.core_type = #tpu.core_type<tc>, window_params = [{pipeline_mode = #tpu.pipeline_mode<synchronous>, transform_indices = @transform_0, window_bounds = array<i64: 9, 8, 4>}, {transform_indices = @transform_1, window_bounds = array<i64: 1, 4, 342>}, {transform_indices = @transform_2, window_bounds = array<i64: 1, 8, 288>}]} {
    %c0 = arith.constant 0 : index
    %c0_0 = arith.constant 0 : index
    %c0_1 = arith.constant 0 : index
    %0 = vector.load %arg2[%c0, %c0_0, %c0_1] : memref<1x4x342xbf16, #tpu.memory_space<vmem>>, vector<1x4x288xbf16>
    %1 = vector.shape_cast %0 : vector<1x4x288xbf16> to vector<4x288xbf16>
    %c0_2 = arith.constant 0 : index
    %c0_3 = arith.constant 0 : index
    %c0_4 = arith.constant 0 : index
    %2 = vector.load %arg1[%c0_2, %c0_3, %c0_4] : memref<9x8x4xbf16, #tpu.memory_space<vmem>>, vector<1x8x4xbf16>
    %3 = vector.shape_cast %2 : vector<1x8x4xbf16> to vector<8x4xbf16>
    %cst = arith.constant dense<0.000000e+00> : vector<8x288xf32>
    %4 = tpu.matmul %3, %1, %cst {dimension_numbers = #tpu.dot_dimension_numbers<[1], [0], [0], [1], [0, 0, 1, 1], [], []>} : vector<8x4xbf16>, vector<4x288xbf16>, vector<8x288xf32> -> vector<8x288xf32>
    %c0_5 = arith.constant 0 : index
    %c0_6 = arith.constant 0 : index
    %c1 = arith.constant 1 : index
    %5 = vector.load %arg2[%c0_5, %c0_6, %c1] : memref<1x4x342xbf16, #tpu.memory_space<vmem>>, vector<1x4x288xbf16>
    %6 = vector.shape_cast %5 : vector<1x4x288xbf16> to vector<4x288xbf16>
    %c1_7 = arith.constant 1 : index
    %c0_8 = arith.constant 0 : index
    %c0_9 = arith.constant 0 : index
    %7 = vector.load %arg1[%c1_7, %c0_8, %c0_9] : memref<9x8x4xbf16, #tpu.memory_space<vmem>>, vector<1x8x4xbf16>
    %8 = vector.shape_cast %7 : vector<1x8x4xbf16> to vector<8x4xbf16>
    %cst_10 = arith.constant dense<0.000000e+00> : vector<8x288xf32>
    %9 = tpu.matmul %8, %6, %cst_10 {dimension_numbers = #tpu.dot_dimension_numbers<[1], [0], [0], [1], [0, 0, 1, 1], [], []>} : vector<8x4xbf16>, vector<4x288xbf16>, vector<8x288xf32> -> vector<8x288xf32>
    %10 = arith.addf %4, %9 : vector<8x288xf32>
    %c0_11 = arith.constant 0 : index
    %c0_12 = arith.constant 0 : index
    %c2 = arith.constant 2 : index
    %11 = vector.load %arg2[%c0_11, %c0_12, %c2] : memref<1x4x342xbf16, #tpu.memory_space<vmem>>, vector<1x4x288xbf16>
    %12 = vector.shape_cast %11 : vector<1x4x288xbf16> to vector<4x288xbf16>
    %c2_13 = arith.constant 2 : index
    %c0_14 = arith.constant 0 : index
    %c0_15 = arith.constant 0 : index
    %13 = vector.load %arg1[%c2_13, %c0_14, %c0_15] : memref<9x8x4xbf16, #tpu.memory_space<vmem>>, vector<1x8x4xbf16>
    %14 = vector.shape_cast %13 : vector<1x8x4xbf16> to vector<8x4xbf16>
    %cst_16 = arith.constant dense<0.000000e+00> : vector<8x288xf32>
    %15 = tpu.matmul %14, %12, %cst_16 {dimension_numbers = #tpu.dot_dimension_numbers<[1], [0], [0], [1], [0, 0, 1, 1], [], []>} : vector<8x4xbf16>, vector<4x288xbf16>, vector<8x288xf32> -> vector<8x288xf32>
    %16 = arith.addf %10, %15 : vector<8x288xf32>
    %c0_17 = arith.constant 0 : index
    %c0_18 = arith.constant 0 : index
    %c18 = arith.constant 18 : index
    %17 = vector.load %arg2[%c0_17, %c0_18, %c18] : memref<1x4x342xbf16, #tpu.memory_space<vmem>>, vector<1x4x288xbf16>
    %18 = vector.shape_cast %17 : vector<1x4x288xbf16> to vector<4x288xbf16>
    %c3 = arith.constant 3 : index
    %c0_19 = arith.constant 0 : index
    %c0_20 = arith.constant 0 : index
    %19 = vector.load %arg1[%c3, %c0_19, %c0_20] : memref<9x8x4xbf16, #tpu.memory_space<vmem>>, vector<1x8x4xbf16>
    %20 = vector.shape_cast %19 : vector<1x8x4xbf16> to vector<8x4xbf16>
    %cst_21 = arith.constant dense<0.000000e+00> : vector<8x288xf32>
    %21 = tpu.matmul %20, %18, %cst_21 {dimension_numbers = #tpu.dot_dimension_numbers<[1], [0], [0], [1], [0, 0, 1, 1], [], []>} : vector<8x4xbf16>, vector<4x288xbf16>, vector<8x288xf32> -> vector<8x288xf32>
    %22 = arith.addf %16, %21 : vector<8x288xf32>
    %c0_22 = arith.constant 0 : index
    %c0_23 = arith.constant 0 : index
    %c19 = arith.constant 19 : index
    %23 = vector.load %arg2[%c0_22, %c0_23, %c19] : memref<1x4x342xbf16, #tpu.memory_space<vmem>>, vector<1x4x288xbf16>
    %24 = vector.shape_cast %23 : vector<1x4x288xbf16> to vector<4x288xbf16>
    %c4 = arith.constant 4 : index
    %c0_24 = arith.constant 0 : index
    %c0_25 = arith.constant 0 : index
    %25 = vector.load %arg1[%c4, %c0_24, %c0_25] : memref<9x8x4xbf16, #tpu.memory_space<vmem>>, vector<1x8x4xbf16>
    %26 = vector.shape_cast %25 : vector<1x8x4xbf16> to vector<8x4xbf16>
    %cst_26 = arith.constant dense<0.000000e+00> : vector<8x288xf32>
    %27 = tpu.matmul %26, %24, %cst_26 {dimension_numbers = #tpu.dot_dimension_numbers<[1], [0], [0], [1], [0, 0, 1, 1], [], []>} : vector<8x4xbf16>, vector<4x288xbf16>, vector<8x288xf32> -> vector<8x288xf32>
    %28 = arith.addf %22, %27 : vector<8x288xf32>
    %c0_27 = arith.constant 0 : index
    %c0_28 = arith.constant 0 : index
    %c20 = arith.constant 20 : index
    %29 = vector.load %arg2[%c0_27, %c0_28, %c20] : memref<1x4x342xbf16, #tpu.memory_space<vmem>>, vector<1x4x288xbf16>
    %30 = vector.shape_cast %29 : vector<1x4x288xbf16> to vector<4x288xbf16>
    %c5 = arith.constant 5 : index
    %c0_29 = arith.constant 0 : index
    %c0_30 = arith.constant 0 : index
    %31 = vector.load %arg1[%c5, %c0_29, %c0_30] : memref<9x8x4xbf16, #tpu.memory_space<vmem>>, vector<1x8x4xbf16>
    %32 = vector.shape_cast %31 : vector<1x8x4xbf16> to vector<8x4xbf16>
    %cst_31 = arith.constant dense<0.000000e+00> : vector<8x288xf32>
    %33 = tpu.matmul %32, %30, %cst_31 {dimension_numbers = #tpu.dot_dimension_numbers<[1], [0], [0], [1], [0, 0, 1, 1], [], []>} : vector<8x4xbf16>, vector<4x288xbf16>, vector<8x288xf32> -> vector<8x288xf32>
    %34 = arith.addf %28, %33 : vector<8x288xf32>
    %c0_32 = arith.constant 0 : index
    %c0_33 = arith.constant 0 : index
    %c36 = arith.constant 36 : index
    %35 = vector.load %arg2[%c0_32, %c0_33, %c36] : memref<1x4x342xbf16, #tpu.memory_space<vmem>>, vector<1x4x288xbf16>
    %36 = vector.shape_cast %35 : vector<1x4x288xbf16> to vector<4x288xbf16>
    %c6 = arith.constant 6 : index
    %c0_34 = arith.constant 0 : index
    %c0_35 = arith.constant 0 : index
    %37 = vector.load %arg1[%c6, %c0_34, %c0_35] : memref<9x8x4xbf16, #tpu.memory_space<vmem>>, vector<1x8x4xbf16>
    %38 = vector.shape_cast %37 : vector<1x8x4xbf16> to vector<8x4xbf16>
    %cst_36 = arith.constant dense<0.000000e+00> : vector<8x288xf32>
    %39 = tpu.matmul %38, %36, %cst_36 {dimension_numbers = #tpu.dot_dimension_numbers<[1], [0], [0], [1], [0, 0, 1, 1], [], []>} : vector<8x4xbf16>, vector<4x288xbf16>, vector<8x288xf32> -> vector<8x288xf32>
    %40 = arith.addf %34, %39 : vector<8x288xf32>
    %c0_37 = arith.constant 0 : index
    %c0_38 = arith.constant 0 : index
    %c37 = arith.constant 37 : index
    %41 = vector.load %arg2[%c0_37, %c0_38, %c37] : memref<1x4x342xbf16, #tpu.memory_space<vmem>>, vector<1x4x288xbf16>
    %42 = vector.shape_cast %41 : vector<1x4x288xbf16> to vector<4x288xbf16>
    %c7 = arith.constant 7 : index
    %c0_39 = arith.constant 0 : index
    %c0_40 = arith.constant 0 : index
    %43 = vector.load %arg1[%c7, %c0_39, %c0_40] : memref<9x8x4xbf16, #tpu.memory_space<vmem>>, vector<1x8x4xbf16>
    %44 = vector.shape_cast %43 : vector<1x8x4xbf16> to vector<8x4xbf16>
    %cst_41 = arith.constant dense<0.000000e+00> : vector<8x288xf32>
    %45 = tpu.matmul %44, %42, %cst_41 {dimension_numbers = #tpu.dot_dimension_numbers<[1], [0], [0], [1], [0, 0, 1, 1], [], []>} : vector<8x4xbf16>, vector<4x288xbf16>, vector<8x288xf32> -> vector<8x288xf32>
    %46 = arith.addf %40, %45 : vector<8x288xf32>
    %c0_42 = arith.constant 0 : index
    %c0_43 = arith.constant 0 : index
    %c38 = arith.constant 38 : index
    %47 = vector.load %arg2[%c0_42, %c0_43, %c38] : memref<1x4x342xbf16, #tpu.memory_space<vmem>>, vector<1x4x288xbf16>
    %48 = vector.shape_cast %47 : vector<1x4x288xbf16> to vector<4x288xbf16>
    %c8 = arith.constant 8 : index
    %c0_44 = arith.constant 0 : index
    %c0_45 = arith.constant 0 : index
    %49 = vector.load %arg1[%c8, %c0_44, %c0_45] : memref<9x8x4xbf16, #tpu.memory_space<vmem>>, vector<1x8x4xbf16>
    %50 = vector.shape_cast %49 : vector<1x8x4xbf16> to vector<8x4xbf16>
    %cst_46 = arith.constant dense<0.000000e+00> : vector<8x288xf32>
    %51 = tpu.matmul %50, %48, %cst_46 {dimension_numbers = #tpu.dot_dimension_numbers<[1], [0], [0], [1], [0, 0, 1, 1], [], []>} : vector<8x4xbf16>, vector<4x288xbf16>, vector<8x288xf32> -> vector<8x288xf32>
    %52 = arith.addf %46, %51 : vector<8x288xf32>
    %c0_47 = arith.constant 0 : index
    %c0_48 = arith.constant 0 : index
    %c0_49 = arith.constant 0 : index
    %53 = vector.load %arg3[%c0_47, %c0_48, %c0_49] : memref<1x8x288xf32, #tpu.memory_space<vmem>>, vector<1x8x288xf32>
    %54 = vector.shape_cast %53 : vector<1x8x288xf32> to vector<8x288xf32>
    %55 = vector.shape_cast %52 : vector<8x288xf32> to vector<1x8x288xf32>
    tpu.vector_store %arg3[%c0_47, %c0_48, %c0_49], %55 {strides = array<i32>} : memref<1x8x288xf32, #tpu.memory_space<vmem>>, vector<1x8x288xf32>,
    return
  }
  func.func @transform_0(%arg0: i32) -> (i32, i32, i32) {
    %c0_i32 = arith.constant 0 : i32
    %c0_i32_0 = arith.constant 0 : i32
    %c0_i32_1 = arith.constant 0 : i32
    %c0_i32_2 = arith.constant 0 : i32
    return %c0_i32, %c0_i32_0, %c0_i32_1 : i32, i32, i32
  }
  func.func @transform_1(%arg0: i32) -> (i32, i32, i32) {
    %c0_i32 = arith.constant 0 : i32
    %c0_i32_0 = arith.constant 0 : i32
    %c0_i32_1 = arith.constant 0 : i32
    return %arg0, %c0_i32, %c0_i32_0 : i32, i32, i32
  }
  func.func @transform_2(%arg0: i32) -> (i32, i32, i32) {
    %c0_i32 = arith.constant 0 : i32
    %c0_i32_0 = arith.constant 0 : i32
    %c0_i32_1 = arith.constant 0 : i32
    return %arg0, %c0_i32, %c0_i32_0 : i32, i32, i32
  }
}

</mosaic_0001>

<llo_original>
// kernel: base_model_forward.1
$region0: #{base_model_forward.1}
  #allocation0 [shape = 'u32[]', space=smem, size = 0x4, offset = 0x4, fixed_abs, tag = 'smem constant byte address 0x4 - core index']
  #allocation1 [shape = 'u32[144,128]{1,0:T(1,128)}', space=vmem, size = 0x12000, scoped, tag = 'internal scratch']
  %s0 = inlined_call_operand.vmem [shape: bf16[9,8,4], index: 0, kind: input, shape index: {}]
  %s1 = inlined_call_operand.vmem [shape: bf16[2,4,342], index: 1, kind: input, shape index: {}]
  %s2 = inlined_call_operand.vmem [shape: f32[2,8,288], index: 2, kind: output, shape index: {}]
  %s3 = sld [smem:[#allocation0]]
  $region41: #{base_model_forward.1} parent=0
    _
  %s5 = ssub.s32 1, %s3
  %s6 = scalar_select 0, %s5, %s3
  loop: start=0, step=1, limit=4
  $region2: #{base_model_forward.1} parent=0 // loop_pre_header
    _
  $region3: #{base_model_forward.1} parent=0 // loop_header
    %s8 = sphi 0, %s12
    %p9 = scmp.ge.s32.totalorder %s8, 4
    %s16 = sphi 0, %s16
    %s18 = sphi 0, %s16
    %s19 = sphi 0, %s18
    %s33 = sphi 0, %s19
    %s39 = sphi 0, %s41
    %s42 = sphi 0, %s39
    %s43 = sphi 0, %s42
    %s59 = sphi 0, %s43
    %s65 = sphi 0, %s67
    %s68 = sphi 0, %s65
    %s69 = sphi 0, %s68
    %s85 = sphi 0, %s69
  $region4: #{base_model_forward.1} parent=0 // loop_header_branch
    %11 = sbr.rel (%p9) target = $region8
  $region5: #{base_model_forward.1} parent=0 // loop_body
    %s13 = ssub.s32 %s8, 1
    %s14 = ssub.s32 %s8, 2
    %s15 = sadd.s32 %s8, 1
    %s17 = sadd.s32 %s16, 1
    %p20 = scmp.eq.s32.totalorder %s8, 1
    %p21 = scmp.ne.s32.totalorder %s16, %s18
    %p22 = scmp.eq.s32.totalorder %s8, 0
    %p23 = por %p21, %p22
    %p24 = scmp.ne.s32.totalorder %s16, %s18
    %p25 = scmp.eq.s32.totalorder %s13, 1
    %p26 = por %p24, %p25
    %p27 = scmp.ne.s32.totalorder %s18, %s19
    %p28 = scmp.eq.s32.totalorder %s13, 0
    %p29 = por %p27, %p28
    %p30 = scmp.ne.s32.totalorder %s18, %s19
    %p31 = scmp.eq.s32.totalorder %s14, 1
    %p32 = por %p30, %p31
    %p34 = scmp.ne.s32.totalorder %s19, %s33
    %p35 = scmp.eq.s32.totalorder %s14, 0
    %p36 = por %p34, %p35
    %s37 = ssub.s32 %s8, %s15
    %p38 = scmp.eq.s32.totalorder %s37, 0
    %s40 = sadd.s32 %s39, 1
    %s41 = scalar_select %p38, %s39, %s40
    %p44 = pneg %p38
    %p45 = scmp.eq.s32.totalorder %s8, 1
    %p46 = por %p44, %p45
    %p47 = scmp.ne.s32.totalorder %s39, %s42
    %p48 = scmp.eq.s32.totalorder %s8, 0
    %p49 = por %p47, %p48
    %p50 = scmp.ne.s32.totalorder %s39, %s42
    %p51 = scmp.eq.s32.totalorder %s13, 1
    %p52 = por %p50, %p51
    %p53 = scmp.ne.s32.totalorder %s42, %s43
    %p54 = scmp.eq.s32.totalorder %s13, 0
    %p55 = por %p53, %p54
    %p56 = scmp.ne.s32.totalorder %s42, %s43
    %p57 = scmp.eq.s32.totalorder %s14, 1
    %p58 = por %p56, %p57
    %p60 = scmp.ne.s32.totalorder %s43, %s59
    %p61 = scmp.eq.s32.totalorder %s14, 0
    %p62 = por %p60, %p61
    %s63 = ssub.s32 %s8, %s15
    %p64 = scmp.eq.s32.totalorder %s63, 0
    %s66 = sadd.s32 %s65, 1
    %s67 = scalar_select %p64, %s65, %s66
    %p70 = pneg %p64
    %p71 = scmp.eq.s32.totalorder %s8, 1
    %p72 = por %p70, %p71
    %p73 = scmp.ne.s32.totalorder %s65, %s68
    %p74 = scmp.eq.s32.totalorder %s8, 0
    %p75 = por %p73, %p74
    %p76 = scmp.ne.s32.totalorder %s65, %s68
    %p77 = scmp.eq.s32.totalorder %s13, 1
    %p78 = por %p76, %p77
    %p79 = scmp.ne.s32.totalorder %s68, %s69
    %p80 = scmp.eq.s32.totalorder %s13, 0
    %p81 = por %p79, %p80
    %p82 = scmp.ne.s32.totalorder %s68, %s69
    %p83 = scmp.eq.s32.totalorder %s14, 1
    %p84 = por %p82, %p83
    %p86 = scmp.ne.s32.totalorder %s69, %s85
    %p87 = scmp.eq.s32.totalorder %s14, 0
    %p88 = por %p86, %p87
    %p89 = scmp.le.s32.totalorder 1, %s8
    %p90 = scmp.lt.s32.totalorder %s8, 3
    %p91 = pnand %p89, %p90
    %p92 = pneg %p91
    // Predicated region
    $region9: #{base_model_forward.1} parent=5 // pred_check
      _
    $region10: #{base_model_forward.1} parent=5 // pred_check_branch
      %94 = sbr.rel (%p91) target = $region12
    $region11: #{base_model_forward.1} parent=5 // pred_region
      %s95 = ssub.s32 %s8, 1
      // Predicated region
      $region13: #{base_model_forward.1} parent=11 // pred_check
        %p96 = pneg %p29
      $region14: #{base_model_forward.1} parent=11 // pred_check_branch
        %98 = sbr.rel (%p96) target = $region16
      $region15: #{base_model_forward.1} parent=11 // pred_region
        _
      $region16: #{base_model_forward.1} parent=11 // pred_fallthru
        _
    $region12: #{base_model_forward.1} parent=5 // pred_fallthru
      _
    %p99 = scmp.lt.s32.totalorder %s8, 2
    // Predicated region
    $region17: #{base_model_forward.1} parent=5 // pred_check
      %p100 = pneg %p99
    $region18: #{base_model_forward.1} parent=5 // pred_check_branch
      %102 = sbr.rel (%p100) target = $region20
    $region19: #{base_model_forward.1} parent=5 // pred_region
      // Predicated region
      $region21: #{base_model_forward.1} parent=19 // pred_check
        %p103 = pneg %p49
      $region22: #{base_model_forward.1} parent=19 // pred_check_branch
        %105 = sbr.rel (%p103) target = $region24
      $region23: #{base_model_forward.1} parent=19 // pred_region
        %p106 = scmp.lt.s32.totalorder %s8, 1
        %s107 = scalar_select %p106, %s8, 1
        %s108 = smul.addr %s107, 3
        %s109 = smul.addr %s108, 2
        %s110 = scalar_lea.vmem %s1, %s109
      $region24: #{base_model_forward.1} parent=19 // pred_fallthru
        _
    $region20: #{base_model_forward.1} parent=5 // pred_fallthru
      _
    %p111 = scmp.le.s32.totalorder 1, %s8
    %p112 = scmp.lt.s32.totalorder %s8, 3
    %p113 = pnand %p111, %p112
    %p114 = pneg %p113
    // Predicated region
    $region25: #{base_model_forward.1} parent=5 // pred_check
      _
    $region26: #{base_model_forward.1} parent=5 // pred_check_branch
      %116 = sbr.rel (%p113) target = $region28
    $region27: #{base_model_forward.1} parent=5 // pred_region
      %s117 = ssub.s32 %s8, 1
      %p118 = pneg %p29
      %p119 = pneg %p26
      %p120 = scmp.lt.s32.totalorder %s13, 1
      %s121 = scalar_select %p120, %s13, 1
      %s122 = smul.addr %s121, 3
      %s123 = smul.addr %s122, 2
      %s124 = scalar_lea.vmem %s1, %s123
      %p125 = pneg %p55
      %p126 = pneg %p52
      %p127 = pneg %p81
      %p128 = pneg %p78
      %p129 = scmp.lt.s32.totalorder %s13, 1
      %s130 = scalar_select %p129, %s13, 1
      %s131 = smul.addr %s130, 3
      %s132 = smul.addr %s131, 8
      %s133 = scalar_lea.vmem %s2, %s132
      %p134 = scmp.lt.s32.totalorder %s13, 1
      %s135 = scalar_select %p134, %s13, 1
      %s136 = smul.addr %s135, 3
      %s137 = smul.addr %s136, 2
      %s138 = scalar_lea.vmem %s1, %s137
      %p139 = scmp.lt.s32.totalorder %s13, 1
      %s140 = scalar_select %p139, %s13, 1
      %s141 = smul.addr %s140, 3
      %s142 = smul.addr %s141, 8
      %s143 = scalar_lea.vmem %s2, %s142
      %v145 = vld [vmem:[%s138] sm:$0x3f]
      %v146 = vld [vmem:[%s0] sm:$0xf]
      %s147 = scalar_lea.vmem %s0, 4
      %v148 = vld [vmem:[%s147] sm:$0xf]
      %v150 = vcombine.high %v145, %v145
      %v152 = vunpack.c.l.s4 1983009808
      %v153 = vunpack.c.0.s8 %v152
      %v154 = vlaneseq
      %v155 = vshrl.u32 %v154, 7
      %v156 = vsub.s32 %v153, %v155
      %v157 = vrot.slane %v145, %v156
      %v159 = vunpack.c.l.s4 1983009808
      %v160 = vunpack.c.0.s8 %v159
      %v161 = vlaneseq
      %v162 = vshrl.u32 %v161, 7
      %v163 = vsub.s32 %v160, %v162
      %v164 = vrot.slane %v150, %v163
      %v165 = vcombine.high %v157, %v157
      %166 = vrot.lane.b32.xlu0 %v157, 127
      %v167 = vpop.permute.xlu0 %166
      %168 = vrot.lane.b32.xlu0 %v165, 127
      %v169 = vpop.permute.xlu0 %168
      %170 = vrot.lane.b32.xlu0 %v164, 127
      %v171 = vpop.permute.xlu0 %170
      %vm172 = vcmask 1039360
      %v173 = vsel %vm172, %v167, %v169
      %v174 = vsel %vm172, %v169, %v171
      %vm175 = vcmask 31744
      %v177 = vsel %vm175, %v148, 0
      %vm179 = vcmask 1041408
      %v181 = vsel %vm179, %v173, 0
      %v184 = vsel %vm179, %v174, 0
      %v187 = vsel %vm179, %v171, 0
      %189 = vmatprep.subr.bf16.mxu0 %v184
      %190 = vmatpush1.bf16.msra.mxu0 %v181
      %191 = vmatprep.subr.bf16.mxu0 0
      %192 = vmatpush1.bf16.msra.mxu0 0
      %193 = vmatprep.subr.bf16.mxu0 0
      %194 = vmatpush1.bf16.msra.mxu0 0
      %195 = vmatprep.subr.bf16.mxu0 0
      %196 = vmatpush1.bf16.msra.mxu0 0
      %197 = vmatprep.subr.bf16.mxu0 0
      %198 = vmatpush1.bf16.msra.mxu0 0
      %199 = vmatprep.subr.bf16.mxu0 0
      %200 = vmatpush1.bf16.msra.mxu0 0
      %201 = vmatprep.subr.bf16.mxu0 0
      %202 = vmatpush1.bf16.msra.mxu0 0
      %203 = vmatprep.subr.bf16.mxu0 0
      %204 = vmatpush1.bf16.msra.mxu0 0
      %205 = vmatprep.subr.bf16.mxu0 0
      %206 = vmatpush1.bf16.msra.mxu0 0
      %207 = vmatprep.subr.bf16.mxu0 0
      %208 = vmatpush1.bf16.msra.mxu0 0
      %209 = vmatprep.subr.bf16.mxu0 0
      %210 = vmatpush1.bf16.msra.mxu0 0
      %211 = vmatprep.subr.bf16.mxu0 0
      %212 = vmatpush1.bf16.msra.mxu0 0
      %213 = vmatprep.subr.bf16.mxu0 0
      %214 = vmatpush1.bf16.msra.mxu0 0
      %215 = vmatprep.subr.bf16.mxu0 0
      %216 = vmatpush1.bf16.msra.mxu0 0
      %217 = vmatprep.subr.bf16.mxu0 0
      %218 = vmatpush1.bf16.msra.mxu0 0
      %219 = vmatprep.subr.bf16.mxu0 0
      %220 = vmatpush1.bf16.msra.mxu0 0
      %221 = vmatprep.mubr.bf16.mxu0 0
      %222 = vmatmul.mubr.bf16.gmra.mrb[0].mxu0 %v177
      %v223 = vpop.f32.mrb[0].mxu0
      %v224 = vadd.f32 0.0, %v223
      %v225 = vpop.f32.mrb[0].mxu0
      %v226 = vadd.f32 0.0, %v225
      %v227 = vpop.f32.mrb[0].mxu0
      %v228 = vpop.f32.mrb[0].mxu0
      %229 = vdwg.mxu0
      %230 = vmatprep.subr.bf16.mxu0 0
      %231 = vmatpush1.bf16.msra.mxu0 %v187
      %232 = vmatprep.subr.bf16.mxu0 0
      %233 = vmatpush1.bf16.msra.mxu0 0
      %234 = vmatprep.subr.bf16.mxu0 0
      %235 = vmatpush1.bf16.msra.mxu0 0
      %236 = vmatprep.subr.bf16.mxu0 0
      %237 = vmatpush1.bf16.msra.mxu0 0
      %238 = vmatprep.subr.bf16.mxu0 0
      %239 = vmatpush1.bf16.msra.mxu0 0
      %240 = vmatprep.subr.bf16.mxu0 0
      %241 = vmatpush1.bf16.msra.mxu0 0
      %242 = vmatprep.subr.bf16.mxu0 0
      %243 = vmatpush1.bf16.msra.mxu0 0
      %244 = vmatprep.subr.bf16.mxu0 0
      %245 = vmatpush1.bf16.msra.mxu0 0
      %246 = vmatprep.subr.bf16.mxu0 0
      %247 = vmatpush1.bf16.msra.mxu0 0
      %248 = vmatprep.subr.bf16.mxu0 0
      %249 = vmatpush1.bf16.msra.mxu0 0
      %250 = vmatprep.subr.bf16.mxu0 0
      %251 = vmatpush1.bf16.msra.mxu0 0
      %252 = vmatprep.subr.bf16.mxu0 0
      %253 = vmatpush1.bf16.msra.mxu0 0
      %254 = vmatprep.subr.bf16.mxu0 0
      %255 = vmatpush1.bf16.msra.mxu0 0
      %256 = vmatprep.subr.bf16.mxu0 0
      %257 = vmatpush1.bf16.msra.mxu0 0
      %258 = vmatprep.subr.bf16.mxu0 0
      %259 = vmatpush1.bf16.msra.mxu0 0
      %260 = vmatprep.subr.bf16.mxu0 0
      %261 = vmatpush1.bf16.msra.mxu0 0
      %262 = vmatprep.mubr.bf16.mxu0 0
      %263 = vmatmul.mubr.bf16.gmra.mrb[0].mxu0 %v177
      %v264 = vpop.f32.mrb[0].mxu0
      %v265 = vadd.f32 0.0, %v264
      %v266 = vpop.f32.mrb[0].mxu0
      %v267 = vpop.f32.mrb[0].mxu0
      %v268 = vpop.f32.mrb[0].mxu0
      %269 = vdwg.mxu0
      %v271 = vsel %vm175, %v146, 0
      %v274 = vsel %vm179, %v157, 0
      %v277 = vsel %vm179, %v165, 0
      %v280 = vsel %vm179, %v164, 0
      %282 = vmatprep.subr.bf16.mxu0 %v277
      %283 = vmatpush1.bf16.msra.mxu0 %v274
      %284 = vmatprep.subr.bf16.mxu0 0
      %285 = vmatpush1.bf16.msra.mxu0 0
      %286 = vmatprep.subr.bf16.mxu0 0
      %287 = vmatpush1.bf16.msra.mxu0 0
      %288 = vmatprep.subr.bf16.mxu0 0
      %289 = vmatpush1.bf16.msra.mxu0 0
      %290 = vmatprep.subr.bf16.mxu0 0
      %291 = vmatpush1.bf16.msra.mxu0 0
      %292 = vmatprep.subr.bf16.mxu0 0
      %293 = vmatpush1.bf16.msra.mxu0 0
      %294 = vmatprep.subr.bf16.mxu0 0
      %295 = vmatpush1.bf16.msra.mxu0 0
      %296 = vmatprep.subr.bf16.mxu0 0
      %297 = vmatpush1.bf16.msra.mxu0 0
      %298 = vmatprep.subr.bf16.mxu0 0
      %299 = vmatpush1.bf16.msra.mxu0 0
      %300 = vmatprep.subr.bf16.mxu0 0
      %301 = vmatpush1.bf16.msra.mxu0 0
      %302 = vmatprep.subr.bf16.mxu0 0
      %303 = vmatpush1.bf16.msra.mxu0 0
      %304 = vmatprep.subr.bf16.mxu0 0
      %305 = vmatpush1.bf16.msra.mxu0 0
      %306 = vmatprep.subr.bf16.mxu0 0
      %307 = vmatpush1.bf16.msra.mxu0 0
      %308 = vmatprep.subr.bf16.mxu0 0
      %309 = vmatpush1.bf16.msra.mxu0 0
      %310 = vmatprep.subr.bf16.mxu0 0
      %311 = vmatpush1.bf16.msra.mxu0 0
      %312 = vmatprep.subr.bf16.mxu0 0
      %313 = vmatpush1.bf16.msra.mxu0 0
      %314 = vmatprep.mubr.bf16.mxu0 0
      %315 = vmatmul.mubr.bf16.gmra.mrb[0].mxu0 %v271
      %v316 = vpop.f32.mrb[0].mxu0
      %v317 = vadd.f32 %v224, %v316
      %v318 = vpop.f32.mrb[0].mxu0
      %v319 = vadd.f32 %v226, %v318
      %v320 = vpop.f32.mrb[0].mxu0
      %v321 = vpop.f32.mrb[0].mxu0
      %322 = vdwg.mxu0
      %323 = vmatprep.subr.bf16.mxu0 0
      %324 = vmatpush1.bf16.msra.mxu0 %v280
      %325 = vmatprep.subr.bf16.mxu0 0
      %326 = vmatpush1.bf16.msra.mxu0 0
      %327 = vmatprep.subr.bf16.mxu0 0
      %328 = vmatpush1.bf16.msra.mxu0 0
      %329 = vmatprep.subr.bf16.mxu0 0
      %330 = vmatpush1.bf16.msra.mxu0 0
      %331 = vmatprep.subr.bf16.mxu0 0
      %332 = vmatpush1.bf16.msra.mxu0 0
      %333 = vmatprep.subr.bf16.mxu0 0
      %334 = vmatpush1.bf16.msra.mxu0 0
      %335 = vmatprep.subr.bf16.mxu0 0
      %336 = vmatpush1.bf16.msra.mxu0 0
      %337 = vmatprep.subr.bf16.mxu0 0
      %338 = vmatpush1.bf16.msra.mxu0 0
      %339 = vmatprep.subr.bf16.mxu0 0
      %340 = vmatpush1.bf16.msra.mxu0 0
      %341 = vmatprep.subr.bf16.mxu0 0
      %342 = vmatpush1.bf16.msra.mxu0 0
      %343 = vmatprep.subr.bf16.mxu0 0
      %344 = vmatpush1.bf16.msra.mxu0 0
      %345 = vmatprep.subr.bf16.mxu0 0
      %346 = vmatpush1.bf16.msra.mxu0 0
      %347 = vmatprep.subr.bf16.mxu0 0
      %348 = vmatpush1.bf16.msra.mxu0 0
      %349 = vmatprep.subr.bf16.mxu0 0
      %350 = vmatpush1.bf16.msra.mxu0 0
      %351 = vmatprep.subr.bf16.mxu0 0
      %352 = vmatpush1.bf16.msra.mxu0 0
      %353 = vmatprep.subr.bf16.mxu0 0
      %354 = vmatpush1.bf16.msra.mxu0 0
      %355 = vmatprep.mubr.bf16.mxu0 0
      %356 = vmatmul.mubr.bf16.gmra.mrb[0].mxu0 %v271
      %v357 = vpop.f32.mrb[0].mxu0
      %v358 = vadd.f32 %v265, %v357
      %v359 = vpop.f32.mrb[0].mxu0
      %v360 = vpop.f32.mrb[0].mxu0
      %v361 = vpop.f32.mrb[0].mxu0
      %362 = vdwg.mxu0
      %v363 = vld [vmem:[%s138] sm:$0x3f]
      %s364 = scalar_lea.vmem %s0, 8
      %v365 = vld [vmem:[%s364] sm:$0xf]
      %v367 = vcombine.high %v363, %v363
      %v369 = vunpack.c.l.s4 1983009808
      %v370 = vunpack.c.0.s8 %v369
      %v371 = vlaneseq
      %v372 = vshrl.u32 %v371, 7
      %v373 = vsub.s32 %v370, %v372
      %v374 = vrot.slane %v363, %v373
      %v376 = vunpack.c.l.s4 1983009808
      %v377 = vunpack.c.0.s8 %v376
      %v378 = vlaneseq
      %v379 = vshrl.u32 %v378, 7
      %v380 = vsub.s32 %v377, %v379
      %v381 = vrot.slane %v367, %v380
      %v382 = vcombine.high %v374, %v374
      %383 = vrot.lane.b32.xlu0 %v374, 126
      %v384 = vpop.permute.xlu0 %383
      %385 = vrot.lane.b32.xlu0 %v382, 126
      %v386 = vpop.permute.xlu0 %385
      %387 = vrot.lane.b32.xlu0 %v381, 126
      %v388 = vpop.permute.xlu0 %387
      %vm389 = vcmask 1031168
      %v390 = vsel %vm389, %v384, %v386
      %v391 = vsel %vm389, %v386, %v388
      %v393 = vsel %vm175, %v365, 0
      %v396 = vsel %vm179, %v390, 0
      %v399 = vsel %vm179, %v391, 0
      %v402 = vsel %vm179, %v388, 0
      %404 = vmatprep.subr.bf16.mxu0 %v399
      %405 = vmatpush1.bf16.msra.mxu0 %v396
      %406 = vmatprep.subr.bf16.mxu0 0
      %407 = vmatpush1.bf16.msra.mxu0 0
      %408 = vmatprep.subr.bf16.mxu0 0
      %409 = vmatpush1.bf16.msra.mxu0 0
      %410 = vmatprep.subr.bf16.mxu0 0
      %411 = vmatpush1.bf16.msra.mxu0 0
      %412 = vmatprep.subr.bf16.mxu0 0
      %413 = vmatpush1.bf16.msra.mxu0 0
      %414 = vmatprep.subr.bf16.mxu0 0
      %415 = vmatpush1.bf16.msra.mxu0 0
      %416 = vmatprep.subr.bf16.mxu0 0
      %417 = vmatpush1.bf16.msra.mxu0 0
      %418 = vmatprep.subr.bf16.mxu0 0
      %419 = vmatpush1.bf16.msra.mxu0 0
      %420 = vmatprep.subr.bf16.mxu0 0
      %421 = vmatpush1.bf16.msra.mxu0 0
      %422 = vmatprep.subr.bf16.mxu0 0
      %423 = vmatpush1.bf16.msra.mxu0 0
      %424 = vmatprep.subr.bf16.mxu0 0
      %425 = vmatpush1.bf16.msra.mxu0 0
      %426 = vmatprep.subr.bf16.mxu0 0
      %427 = vmatpush1.bf16.msra.mxu0 0
      %428 = vmatprep.subr.bf16.mxu0 0
      %429 = vmatpush1.bf16.msra.mxu0 0
      %430 = vmatprep.subr.bf16.mxu0 0
      %431 = vmatpush1.bf16.msra.mxu0 0
      %432 = vmatprep.subr.bf16.mxu0 0
      %433 = vmatpush1.bf16.msra.mxu0 0
      %434 = vmatprep.subr.bf16.mxu0 0
      %435 = vmatpush1.bf16.msra.mxu0 0
      %436 = vmatprep.mubr.bf16.mxu0 0
      %437 = vmatmul.mubr.bf16.gmra.mrb[0].mxu0 %v393
      %v438 = vpop.f32.mrb[0].mxu0
      %v439 = vadd.f32 0.0, %v438
      %v440 = vpop.f32.mrb[0].mxu0
      %v441 = vadd.f32 0.0, %v440
      %v442 = vpop.f32.mrb[0].mxu0
      %v443 = vpop.f32.mrb[0].mxu0
      %444 = vdwg.mxu0
      %445 = vmatprep.subr.bf16.mxu0 0
      %446 = vmatpush1.bf16.msra.mxu0 %v402
      %447 = vmatprep.subr.bf16.mxu0 0
      %448 = vmatpush1.bf16.msra.mxu0 0
      %449 = vmatprep.subr.bf16.mxu0 0
      %450 = vmatpush1.bf16.msra.mxu0 0
      %451 = vmatprep.subr.bf16.mxu0 0
      %452 = vmatpush1.bf16.msra.mxu0 0
      %453 = vmatprep.subr.bf16.mxu0 0
      %454 = vmatpush1.bf16.msra.mxu0 0
      %455 = vmatprep.subr.bf16.mxu0 0
      %456 = vmatpush1.bf16.msra.mxu0 0
      %457 = vmatprep.subr.bf16.mxu0 0
      %458 = vmatpush1.bf16.msra.mxu0 0
      %459 = vmatprep.subr.bf16.mxu0 0
      %460 = vmatpush1.bf16.msra.mxu0 0
      %461 = vmatprep.subr.bf16.mxu0 0
      %462 = vmatpush1.bf16.msra.mxu0 0
      %463 = vmatprep.subr.bf16.mxu0 0
      %464 = vmatpush1.bf16.msra.mxu0 0
      %465 = vmatprep.subr.bf16.mxu0 0
      %466 = vmatpush1.bf16.msra.mxu0 0
      %467 = vmatprep.subr.bf16.mxu0 0
      %468 = vmatpush1.bf16.msra.mxu0 0
      %469 = vmatprep.subr.bf16.mxu0 0
      %470 = vmatpush1.bf16.msra.mxu0 0
      %471 = vmatprep.subr.bf16.mxu0 0
      %472 = vmatpush1.bf16.msra.mxu0 0
      %473 = vmatprep.subr.bf16.mxu0 0
      %474 = vmatpush1.bf16.msra.mxu0 0
      %475 = vmatprep.subr.bf16.mxu0 0
      %476 = vmatpush1.bf16.msra.mxu0 0
      %477 = vmatprep.mubr.bf16.mxu0 0
      %478 = vmatmul.mubr.bf16.gmra.mrb[0].mxu0 %v393
      %v479 = vpop.f32.mrb[0].mxu0
      %v480 = vadd.f32 0.0, %v479
      %v481 = vpop.f32.mrb[0].mxu0
      %v482 = vpop.f32.mrb[0].mxu0
      %v483 = vpop.f32.mrb[0].mxu0
      %484 = vdwg.mxu0
      %v485 = vadd.f32 %v317, %v439
      %v486 = vadd.f32 %v319, %v441
      %v487 = vadd.f32 %v358, %v480
      %v488 = vld [vmem:[%s138] sm:$0x3f]
      %s489 = scalar_lea.vmem %s0, 12
      %v490 = vld [vmem:[%s489] sm:$0xf]
      %v492 = vcombine.high %v488, %v488
      %v494 = vunpack.c.l.s4 1983009808
      %v495 = vunpack.c.0.s8 %v494
      %v496 = vlaneseq
      %v497 = vshrl.u32 %v496, 7
      %v498 = vsub.s32 %v495, %v497
      %v499 = vrot.slane %v488, %v498
      %v501 = vunpack.c.l.s4 1983009808
      %v502 = vunpack.c.0.s8 %v501
      %v503 = vlaneseq
      %v504 = vshrl.u32 %v503, 7
      %v505 = vsub.s32 %v502, %v504
      %v506 = vrot.slane %v492, %v505
      %v507 = vcombine.high %v499, %v499
      %508 = vrot.lane.b32.xlu0 %v499, 110
      %v509 = vpop.permute.xlu0 %508
      %510 = vrot.lane.b32.xlu0 %v507, 110
      %v511 = vpop.permute.xlu0 %510
      %512 = vrot.lane.b32.xlu0 %v506, 110
      %v513 = vpop.permute.xlu0 %512
      %vm514 = vcmask 900096
      %v515 = vsel %vm514, %v509, %v511
      %v516 = vsel %vm514, %v511, %v513
      %v518 = vsel %vm175, %v490, 0
      %v521 = vsel %vm179, %v515, 0
      %v524 = vsel %vm179, %v516, 0
      %v527 = vsel %vm179, %v513, 0
      %529 = vmatprep.subr.bf16.mxu0 %v524
      %530 = vmatpush1.bf16.msra.mxu0 %v521
      %531 = vmatprep.subr.bf16.mxu0 0
      %532 = vmatpush1.bf16.msra.mxu0 0
      %533 = vmatprep.subr.bf16.mxu0 0
      %534 = vmatpush1.bf16.msra.mxu0 0
      %535 = vmatprep.subr.bf16.mxu0 0
      %536 = vmatpush1.bf16.msra.mxu0 0
      %537 = vmatprep.subr.bf16.mxu0 0
      %538 = vmatpush1.bf16.msra.mxu0 0
      %539 = vmatprep.subr.bf16.mxu0 0
      %540 = vmatpush1.bf16.msra.mxu0 0
      %541 = vmatprep.subr.bf16.mxu0 0
      %542 = vmatpush1.bf16.msra.mxu0 0
      %543 = vmatprep.subr.bf16.mxu0 0
      %544 = vmatpush1.bf16.msra.mxu0 0
      %545 = vmatprep.subr.bf16.mxu0 0
      %546 = vmatpush1.bf16.msra.mxu0 0
      %547 = vmatprep.subr.bf16.mxu0 0
      %548 = vmatpush1.bf16.msra.mxu0 0
      %549 = vmatprep.subr.bf16.mxu0 0
      %550 = vmatpush1.bf16.msra.mxu0 0
      %551 = vmatprep.subr.bf16.mxu0 0
      %552 = vmatpush1.bf16.msra.mxu0 0
      %553 = vmatprep.subr.bf16.mxu0 0
      %554 = vmatpush1.bf16.msra.mxu0 0
      %555 = vmatprep.subr.bf16.mxu0 0
      %556 = vmatpush1.bf16.msra.mxu0 0
      %557 = vmatprep.subr.bf16.mxu0 0
      %558 = vmatpush1.bf16.msra.mxu0 0
      %559 = vmatprep.subr.bf16.mxu0 0
      %560 = vmatpush1.bf16.msra.mxu0 0
      %561 = vmatprep.mubr.bf16.mxu0 0
      %562 = vmatmul.mubr.bf16.gmra.mrb[0].mxu0 %v518
      %v563 = vpop.f32.mrb[0].mxu0
      %v564 = vadd.f32 0.0, %v563
      %v565 = vpop.f32.mrb[0].mxu0
      %v566 = vadd.f32 0.0, %v565
      %v567 = vpop.f32.mrb[0].mxu0
      %v568 = vpop.f32.mrb[0].mxu0
      %569 = vdwg.mxu0
      %570 = vmatprep.subr.bf16.mxu0 0
      %571 = vmatpush1.bf16.msra.mxu0 %v527
      %572 = vmatprep.subr.bf16.mxu0 0
      %573 = vmatpush1.bf16.msra.mxu0 0
      %574 = vmatprep.subr.bf16.mxu0 0
      %575 = vmatpush1.bf16.msra.mxu0 0
      %576 = vmatprep.subr.bf16.mxu0 0
      %577 = vmatpush1.bf16.msra.mxu0 0
      %578 = vmatprep.subr.bf16.mxu0 0
      %579 = vmatpush1.bf16.msra.mxu0 0
      %580 = vmatprep.subr.bf16.mxu0 0
      %581 = vmatpush1.bf16.msra.mxu0 0
      %582 = vmatprep.subr.bf16.mxu0 0
      %583 = vmatpush1.bf16.msra.mxu0 0
      %584 = vmatprep.subr.bf16.mxu0 0
      %585 = vmatpush1.bf16.msra.mxu0 0
      %586 = vmatprep.subr.bf16.mxu0 0
      %587 = vmatpush1.bf16.msra.mxu0 0
      %588 = vmatprep.subr.bf16.mxu0 0
      %589 = vmatpush1.bf16.msra.mxu0 0
      %590 = vmatprep.subr.bf16.mxu0 0
      %591 = vmatpush1.bf16.msra.mxu0 0
      %592 = vmatprep.subr.bf16.mxu0 0
      %593 = vmatpush1.bf16.msra.mxu0 0
      %594 = vmatprep.subr.bf16.mxu0 0
      %595 = vmatpush1.bf16.msra.mxu0 0
      %596 = vmatprep.subr.bf16.mxu0 0
      %597 = vmatpush1.bf16.msra.mxu0 0
      %598 = vmatprep.subr.bf16.mxu0 0
      %599 = vmatpush1.bf16.msra.mxu0 0
      %600 = vmatprep.subr.bf16.mxu0 0
      %601 = vmatpush1.bf16.msra.mxu0 0
      %602 = vmatprep.mubr.bf16.mxu0 0
      %603 = vmatmul.mubr.bf16.gmra.mrb[0].mxu0 %v518
      %v604 = vpop.f32.mrb[0].mxu0
      %v605 = vadd.f32 0.0, %v604
      %v606 = vpop.f32.mrb[0].mxu0
      %v607 = vpop.f32.mrb[0].mxu0
      %v608 = vpop.f32.mrb[0].mxu0
      %609 = vdwg.mxu0
      %v610 = vadd.f32 %v485, %v564
      %v611 = vadd.f32 %v486, %v566
      %v612 = vadd.f32 %v487, %v605
      %v613 = vld [vmem:[%s138] sm:$0x3f]
      %s614 = scalar_lea.vmem %s0, 16
      %v615 = vld [vmem:[%s614] sm:$0xf]
      %v617 = vcombine.high %v613, %v613
      %v619 = vunpack.c.l.s4 1983009808
      %v620 = vunpack.c.0.s8 %v619
      %v621 = vlaneseq
      %v622 = vshrl.u32 %v621, 7
      %v623 = vsub.s32 %v620, %v622
      %v624 = vrot.slane %v613, %v623
      %v626 = vunpack.c.l.s4 1983009808
      %v627 = vunpack.c.0.s8 %v626
      %v628 = vlaneseq
      %v629 = vshrl.u32 %v628, 7
      %v630 = vsub.s32 %v627, %v629
      %v631 = vrot.slane %v617, %v630
      %v632 = vcombine.high %v624, %v624
      %633 = vrot.lane.b32.xlu0 %v624, 109
      %v634 = vpop.permute.xlu0 %633
      %635 = vrot.lane.b32.xlu0 %v632, 109
      %v636 = vpop.permute.xlu0 %635
      %637 = vrot.lane.b32.xlu0 %v631, 109
      %v638 = vpop.permute.xlu0 %637
      %vm639 = vcmask 891904
      %v640 = vsel %vm639, %v634, %v636
      %v641 = vsel %vm639, %v636, %v638
      %v643 = vsel %vm175, %v615, 0
      %v646 = vsel %vm179, %v640, 0
      %v649 = vsel %vm179, %v641, 0
      %v652 = vsel %vm179, %v638, 0
      %654 = vmatprep.subr.bf16.mxu0 %v649
      %655 = vmatpush1.bf16.msra.mxu0 %v646
      %656 = vmatprep.subr.bf16.mxu0 0
      %657 = vmatpush1.bf16.msra.mxu0 0
      %658 = vmatprep.subr.bf16.mxu0 0
      %659 = vmatpush1.bf16.msra.mxu0 0
      %660 = vmatprep.subr.bf16.mxu0 0
      %661 = vmatpush1.bf16.msra.mxu0 0
      %662 = vmatprep.subr.bf16.mxu0 0
      %663 = vmatpush1.bf16.msra.mxu0 0
      %664 = vmatprep.subr.bf16.mxu0 0
      %665 = vmatpush1.bf16.msra.mxu0 0
      %666 = vmatprep.subr.bf16.mxu0 0
      %667 = vmatpush1.bf16.msra.mxu0 0
      %668 = vmatprep.subr.bf16.mxu0 0
      %669 = vmatpush1.bf16.msra.mxu0 0
      %670 = vmatprep.subr.bf16.mxu0 0
      %671 = vmatpush1.bf16.msra.mxu0 0
      %672 = vmatprep.subr.bf16.mxu0 0
      %673 = vmatpush1.bf16.msra.mxu0 0
      %674 = vmatprep.subr.bf16.mxu0 0
      %675 = vmatpush1.bf16.msra.mxu0 0
      %676 = vmatprep.subr.bf16.mxu0 0
      %677 = vmatpush1.bf16.msra.mxu0 0
      %678 = vmatprep.subr.bf16.mxu0 0
      %679 = vmatpush1.bf16.msra.mxu0 0
      %680 = vmatprep.subr.bf16.mxu0 0
      %681 = vmatpush1.bf16.msra.mxu0 0
      %682 = vmatprep.subr.bf16.mxu0 0
      %683 = vmatpush1.bf16.msra.mxu0 0
      %684 = vmatprep.subr.bf16.mxu0 0
      %685 = vmatpush1.bf16.msra.mxu0 0
      %686 = vmatprep.mubr.bf16.mxu0 0
      %687 = vmatmul.mubr.bf16.gmra.mrb[0].mxu0 %v643
      %v688 = vpop.f32.mrb[0].mxu0
      %v689 = vadd.f32 0.0, %v688
      %v690 = vpop.f32.mrb[0].mxu0
      %v691 = vadd.f32 0.0, %v690
      %v692 = vpop.f32.mrb[0].mxu0
      %v693 = vpop.f32.mrb[0].mxu0
      %694 = vdwg.mxu0
      %695 = vmatprep.subr.bf16.mxu0 0
      %696 = vmatpush1.bf16.msra.mxu0 %v652
      %697 = vmatprep.subr.bf16.mxu0 0
      %698 = vmatpush1.bf16.msra.mxu0 0
      %699 = vmatprep.subr.bf16.mxu0 0
      %700 = vmatpush1.bf16.msra.mxu0 0
      %701 = vmatprep.subr.bf16.mxu0 0
      %702 = vmatpush1.bf16.msra.mxu0 0
      %703 = vmatprep.subr.bf16.mxu0 0
      %704 = vmatpush1.bf16.msra.mxu0 0
      %705 = vmatprep.subr.bf16.mxu0 0
      %706 = vmatpush1.bf16.msra.mxu0 0
      %707 = vmatprep.subr.bf16.mxu0 0
      %708 = vmatpush1.bf16.msra.mxu0 0
      %709 = vmatprep.subr.bf16.mxu0 0
      %710 = vmatpush1.bf16.msra.mxu0 0
      %711 = vmatprep.subr.bf16.mxu0 0
      %712 = vmatpush1.bf16.msra.mxu0 0
      %713 = vmatprep.subr.bf16.mxu0 0
      %714 = vmatpush1.bf16.msra.mxu0 0
      %715 = vmatprep.subr.bf16.mxu0 0
      %716 = vmatpush1.bf16.msra.mxu0 0
      %717 = vmatprep.subr.bf16.mxu0 0
      %718 = vmatpush1.bf16.msra.mxu0 0
      %719 = vmatprep.subr.bf16.mxu0 0
      %720 = vmatpush1.bf16.msra.mxu0 0
      %721 = vmatprep.subr.bf16.mxu0 0
      %722 = vmatpush1.bf16.msra.mxu0 0
      %723 = vmatprep.subr.bf16.mxu0 0
      %724 = vmatpush1.bf16.msra.mxu0 0
      %725 = vmatprep.subr.bf16.mxu0 0
      %726 = vmatpush1.bf16.msra.mxu0 0
      %727 = vmatprep.mubr.bf16.mxu0 0
      %728 = vmatmul.mubr.bf16.gmra.mrb[0].mxu0 %v643
      %v729 = vpop.f32.mrb[0].mxu0
      %v730 = vadd.f32 0.0, %v729
      %v731 = vpop.f32.mrb[0].mxu0
      %v732 = vpop.f32.mrb[0].mxu0
      %v733 = vpop.f32.mrb[0].mxu0
      %734 = vdwg.mxu0
      %v735 = vadd.f32 %v610, %v689
      %v736 = vadd.f32 %v611, %v691
      %v737 = vadd.f32 %v612, %v730
      %v738 = vld [vmem:[%s138] sm:$0x3f]
      %s739 = scalar_lea.vmem %s0, 20
      %v740 = vld [vmem:[%s739] sm:$0xf]
      %v742 = vcombine.high %v738, %v738
      %v744 = vunpack.c.l.s4 1983009808
      %v745 = vunpack.c.0.s8 %v744
      %v746 = vlaneseq
      %v747 = vshrl.u32 %v746, 7
      %v748 = vsub.s32 %v745, %v747
      %v749 = vrot.slane %v738, %v748
      %v751 = vunpack.c.l.s4 1983009808
      %v752 = vunpack.c.0.s8 %v751
      %v753 = vlaneseq
      %v754 = vshrl.u32 %v753, 7
      %v755 = vsub.s32 %v752, %v754
      %v756 = vrot.slane %v742, %v755
      %v757 = vcombine.high %v749, %v749
      %758 = vrot.lane.b32.xlu0 %v749, 108
      %v759 = vpop.permute.xlu0 %758
      %760 = vrot.lane.b32.xlu0 %v757, 108
      %v761 = vpop.permute.xlu0 %760
      %762 = vrot.lane.b32.xlu0 %v756, 108
      %v763 = vpop.permute.xlu0 %762
      %vm764 = vcmask 883712
      %v765 = vsel %vm764, %v759, %v761
      %v766 = vsel %vm764, %v761, %v763
      %v768 = vsel %vm175, %v740, 0
      %v771 = vsel %vm179, %v765, 0
      %v774 = vsel %vm179, %v766, 0
      %v777 = vsel %vm179, %v763, 0
      %779 = vmatprep.subr.bf16.mxu0 %v774
      %780 = vmatpush1.bf16.msra.mxu0 %v771
      %781 = vmatprep.subr.bf16.mxu0 0
      %782 = vmatpush1.bf16.msra.mxu0 0
      %783 = vmatprep.subr.bf16.mxu0 0
      %784 = vmatpush1.bf16.msra.mxu0 0
      %785 = vmatprep.subr.bf16.mxu0 0
      %786 = vmatpush1.bf16.msra.mxu0 0
      %787 = vmatprep.subr.bf16.mxu0 0
      %788 = vmatpush1.bf16.msra.mxu0 0
      %789 = vmatprep.subr.bf16.mxu0 0
      %790 = vmatpush1.bf16.msra.mxu0 0
      %791 = vmatprep.subr.bf16.mxu0 0
      %792 = vmatpush1.bf16.msra.mxu0 0
      %793 = vmatprep.subr.bf16.mxu0 0
      %794 = vmatpush1.bf16.msra.mxu0 0
      %795 = vmatprep.subr.bf16.mxu0 0
      %796 = vmatpush1.bf16.msra.mxu0 0
      %797 = vmatprep.subr.bf16.mxu0 0
      %798 = vmatpush1.bf16.msra.mxu0 0
      %799 = vmatprep.subr.bf16.mxu0 0
      %800 = vmatpush1.bf16.msra.mxu0 0
      %801 = vmatprep.subr.bf16.mxu0 0
      %802 = vmatpush1.bf16.msra.mxu0 0
      %803 = vmatprep.subr.bf16.mxu0 0
      %804 = vmatpush1.bf16.msra.mxu0 0
      %805 = vmatprep.subr.bf16.mxu0 0
      %806 = vmatpush1.bf16.msra.mxu0 0
      %807 = vmatprep.subr.bf16.mxu0 0
      %808 = vmatpush1.bf16.msra.mxu0 0
      %809 = vmatprep.subr.bf16.mxu0 0
      %810 = vmatpush1.bf16.msra.mxu0 0
      %811 = vmatprep.mubr.bf16.mxu0 0
      %812 = vmatmul.mubr.bf16.gmra.mrb[0].mxu0 %v768
      %v813 = vpop.f32.mrb[0].mxu0
      %v814 = vadd.f32 0.0, %v813
      %v815 = vpop.f32.mrb[0].mxu0
      %v816 = vadd.f32 0.0, %v815
      %v817 = vpop.f32.mrb[0].mxu0
      %v818 = vpop.f32.mrb[0].mxu0
      %819 = vdwg.mxu0
      %820 = vmatprep.subr.bf16.mxu0 0
      %821 = vmatpush1.bf16.msra.mxu0 %v777
      %822 = vmatprep.subr.bf16.mxu0 0
      %823 = vmatpush1.bf16.msra.mxu0 0
      %824 = vmatprep.subr.bf16.mxu0 0
      %825 = vmatpush1.bf16.msra.mxu0 0
      %826 = vmatprep.subr.bf16.mxu0 0
      %827 = vmatpush1.bf16.msra.mxu0 0
      %828 = vmatprep.subr.bf16.mxu0 0
      %829 = vmatpush1.bf16.msra.mxu0 0
      %830 = vmatprep.subr.bf16.mxu0 0
      %831 = vmatpush1.bf16.msra.mxu0 0
      %832 = vmatprep.subr.bf16.mxu0 0
      %833 = vmatpush1.bf16.msra.mxu0 0
      %834 = vmatprep.subr.bf16.mxu0 0
      %835 = vmatpush1.bf16.msra.mxu0 0
      %836 = vmatprep.subr.bf16.mxu0 0
      %837 = vmatpush1.bf16.msra.mxu0 0
      %838 = vmatprep.subr.bf16.mxu0 0
      %839 = vmatpush1.bf16.msra.mxu0 0
      %840 = vmatprep.subr.bf16.mxu0 0
      %841 = vmatpush1.bf16.msra.mxu0 0
      %842 = vmatprep.subr.bf16.mxu0 0
      %843 = vmatpush1.bf16.msra.mxu0 0
      %844 = vmatprep.subr.bf16.mxu0 0
      %845 = vmatpush1.bf16.msra.mxu0 0
      %846 = vmatprep.subr.bf16.mxu0 0
      %847 = vmatpush1.bf16.msra.mxu0 0
      %848 = vmatprep.subr.bf16.mxu0 0
      %849 = vmatpush1.bf16.msra.mxu0 0
      %850 = vmatprep.subr.bf16.mxu0 0
      %851 = vmatpush1.bf16.msra.mxu0 0
      %852 = vmatprep.mubr.bf16.mxu0 0
      %853 = vmatmul.mubr.bf16.gmra.mrb[0].mxu0 %v768
      %v854 = vpop.f32.mrb[0].mxu0
      %v855 = vadd.f32 0.0, %v854
      %v856 = vpop.f32.mrb[0].mxu0
      %v857 = vpop.f32.mrb[0].mxu0
      %v858 = vpop.f32.mrb[0].mxu0
      %859 = vdwg.mxu0
      %v860 = vadd.f32 %v735, %v814
      %v861 = vadd.f32 %v736, %v816
      %v862 = vadd.f32 %v737, %v855
      %v863 = vld [vmem:[%s138] sm:$0x3f]
      %s864 = scalar_lea.vmem %s0, 24
      %v865 = vld [vmem:[%s864] sm:$0xf]
      %v867 = vcombine.high %v863, %v863
      %v869 = vunpack.c.l.s4 1983009808
      %v870 = vunpack.c.0.s8 %v869
      %v871 = vlaneseq
      %v872 = vshrl.u32 %v871, 7
      %v873 = vsub.s32 %v870, %v872
      %v874 = vrot.slane %v863, %v873
      %v876 = vunpack.c.l.s4 1983009808
      %v877 = vunpack.c.0.s8 %v876
      %v878 = vlaneseq
      %v879 = vshrl.u32 %v878, 7
      %v880 = vsub.s32 %v877, %v879
      %v881 = vrot.slane %v867, %v880
      %v882 = vcombine.high %v874, %v874
      %883 = vrot.lane.b32.xlu0 %v874, 92
      %v884 = vpop.permute.xlu0 %883
      %885 = vrot.lane.b32.xlu0 %v882, 92
      %v886 = vpop.permute.xlu0 %885
      %887 = vrot.lane.b32.xlu0 %v881, 92
      %v888 = vpop.permute.xlu0 %887
      %vm889 = vcmask 752640
      %v890 = vsel %vm889, %v884, %v886
      %v891 = vsel %vm889, %v886, %v888
      %v893 = vsel %vm175, %v865, 0
      %v896 = vsel %vm179, %v890, 0
      %v899 = vsel %vm179, %v891, 0
      %v902 = vsel %vm179, %v888, 0
      %904 = vmatprep.subr.bf16.mxu0 %v899
      %905 = vmatpush1.bf16.msra.mxu0 %v896
      %906 = vmatprep.subr.bf16.mxu0 0
      %907 = vmatpush1.bf16.msra.mxu0 0
      %908 = vmatprep.subr.bf16.mxu0 0
      %909 = vmatpush1.bf16.msra.mxu0 0
      %910 = vmatprep.subr.bf16.mxu0 0
      %911 = vmatpush1.bf16.msra.mxu0 0
      %912 = vmatprep.subr.bf16.mxu0 0
      %913 = vmatpush1.bf16.msra.mxu0 0
      %914 = vmatprep.subr.bf16.mxu0 0
      %915 = vmatpush1.bf16.msra.mxu0 0
      %916 = vmatprep.subr.bf16.mxu0 0
      %917 = vmatpush1.bf16.msra.mxu0 0
      %918 = vmatprep.subr.bf16.mxu0 0
      %919 = vmatpush1.bf16.msra.mxu0 0
      %920 = vmatprep.subr.bf16.mxu0 0
      %921 = vmatpush1.bf16.msra.mxu0 0
      %922 = vmatprep.subr.bf16.mxu0 0
      %923 = vmatpush1.bf16.msra.mxu0 0
      %924 = vmatprep.subr.bf16.mxu0 0
      %925 = vmatpush1.bf16.msra.mxu0 0
      %926 = vmatprep.subr.bf16.mxu0 0
      %927 = vmatpush1.bf16.msra.mxu0 0
      %928 = vmatprep.subr.bf16.mxu0 0
      %929 = vmatpush1.bf16.msra.mxu0 0
      %930 = vmatprep.subr.bf16.mxu0 0
      %931 = vmatpush1.bf16.msra.mxu0 0
      %932 = vmatprep.subr.bf16.mxu0 0
      %933 = vmatpush1.bf16.msra.mxu0 0
      %934 = vmatprep.subr.bf16.mxu0 0
      %935 = vmatpush1.bf16.msra.mxu0 0
      %936 = vmatprep.mubr.bf16.mxu0 0
      %937 = vmatmul.mubr.bf16.gmra.mrb[0].mxu0 %v893
      %v938 = vpop.f32.mrb[0].mxu0
      %v939 = vadd.f32 0.0, %v938
      %v940 = vpop.f32.mrb[0].mxu0
      %v941 = vadd.f32 0.0, %v940
      %v942 = vpop.f32.mrb[0].mxu0
      %v943 = vpop.f32.mrb[0].mxu0
      %944 = vdwg.mxu0
      %945 = vmatprep.subr.bf16.mxu0 0
      %946 = vmatpush1.bf16.msra.mxu0 %v902
      %947 = vmatprep.subr.bf16.mxu0 0
      %948 = vmatpush1.bf16.msra.mxu0 0
      %949 = vmatprep.subr.bf16.mxu0 0
      %950 = vmatpush1.bf16.msra.mxu0 0
      %951 = vmatprep.subr.bf16.mxu0 0
      %952 = vmatpush1.bf16.msra.mxu0 0
      %953 = vmatprep.subr.bf16.mxu0 0
      %954 = vmatpush1.bf16.msra.mxu0 0
      %955 = vmatprep.subr.bf16.mxu0 0
      %956 = vmatpush1.bf16.msra.mxu0 0
      %957 = vmatprep.subr.bf16.mxu0 0
      %958 = vmatpush1.bf16.msra.mxu0 0
      %959 = vmatprep.subr.bf16.mxu0 0
      %960 = vmatpush1.bf16.msra.mxu0 0
      %961 = vmatprep.subr.bf16.mxu0 0
      %962 = vmatpush1.bf16.msra.mxu0 0
      %963 = vmatprep.subr.bf16.mxu0 0
      %964 = vmatpush1.bf16.msra.mxu0 0
      %965 = vmatprep.subr.bf16.mxu0 0
      %966 = vmatpush1.bf16.msra.mxu0 0
      %967 = vmatprep.subr.bf16.mxu0 0
      %968 = vmatpush1.bf16.msra.mxu0 0
      %969 = vmatprep.subr.bf16.mxu0 0
      %970 = vmatpush1.bf16.msra.mxu0 0
      %971 = vmatprep.subr.bf16.mxu0 0
      %972 = vmatpush1.bf16.msra.mxu0 0
      %973 = vmatprep.subr.bf16.mxu0 0
      %974 = vmatpush1.bf16.msra.mxu0 0
      %975 = vmatprep.subr.bf16.mxu0 0
      %976 = vmatpush1.bf16.msra.mxu0 0
      %977 = vmatprep.mubr.bf16.mxu0 0
      %978 = vmatmul.mubr.bf16.gmra.mrb[0].mxu0 %v893
      %v979 = vpop.f32.mrb[0].mxu0
      %v980 = vadd.f32 0.0, %v979
      %v981 = vpop.f32.mrb[0].mxu0
      %v982 = vpop.f32.mrb[0].mxu0
      %v983 = vpop.f32.mrb[0].mxu0
      %984 = vdwg.mxu0
      %v985 = vadd.f32 %v860, %v939
      %v986 = vadd.f32 %v861, %v941
      %v987 = vadd.f32 %v862, %v980
      %v988 = vld [vmem:[%s138] sm:$0x3f]
      %s989 = scalar_lea.vmem %s0, 28
      %v990 = vld [vmem:[%s989] sm:$0xf]
      %v992 = vcombine.high %v988, %v988
      %v994 = vunpack.c.l.s4 1983009808
      %v995 = vunpack.c.0.s8 %v994
      %v996 = vlaneseq
      %v997 = vshrl.u32 %v996, 7
      %v998 = vsub.s32 %v995, %v997
      %v999 = vrot.slane %v988, %v998
      %v1001 = vunpack.c.l.s4 1983009808
      %v1002 = vunpack.c.0.s8 %v1001
      %v1003 = vlaneseq
      %v1004 = vshrl.u32 %v1003, 7
      %v1005 = vsub.s32 %v1002, %v1004
      %v1006 = vrot.slane %v992, %v1005
      %v1007 = vcombine.high %v999, %v999
      %1008 = vrot.lane.b32.xlu0 %v999, 91
      %v1009 = vpop.permute.xlu0 %1008
      %1010 = vrot.lane.b32.xlu0 %v1007, 91
      %v1011 = vpop.permute.xlu0 %1010
      %1012 = vrot.lane.b32.xlu0 %v1006, 91
      %v1013 = vpop.permute.xlu0 %1012
      %vm1014 = vcmask 744448
      %v1015 = vsel %vm1014, %v1009, %v1011
      %v1016 = vsel %vm1014, %v1011, %v1013
      %v1018 = vsel %vm175, %v990, 0
      %v1021 = vsel %vm179, %v1015, 0
      %v1024 = vsel %vm179, %v1016, 0
      %v1027 = vsel %vm179, %v1013, 0
      %1029 = vmatprep.subr.bf16.mxu0 %v1024
      %1030 = vmatpush1.bf16.msra.mxu0 %v1021
      %1031 = vmatprep.subr.bf16.mxu0 0
      %1032 = vmatpush1.bf16.msra.mxu0 0
      %1033 = vmatprep.subr.bf16.mxu0 0
      %1034 = vmatpush1.bf16.msra.mxu0 0
      %1035 = vmatprep.subr.bf16.mxu0 0
      %1036 = vmatpush1.bf16.msra.mxu0 0
      %1037 = vmatprep.subr.bf16.mxu0 0
      %1038 = vmatpush1.bf16.msra.mxu0 0
      %1039 = vmatprep.subr.bf16.mxu0 0
      %1040 = vmatpush1.bf16.msra.mxu0 0
      %1041 = vmatprep.subr.bf16.mxu0 0
      %1042 = vmatpush1.bf16.msra.mxu0 0
      %1043 = vmatprep.subr.bf16.mxu0 0
      %1044 = vmatpush1.bf16.msra.mxu0 0
      %1045 = vmatprep.subr.bf16.mxu0 0
      %1046 = vmatpush1.bf16.msra.mxu0 0
      %1047 = vmatprep.subr.bf16.mxu0 0
      %1048 = vmatpush1.bf16.msra.mxu0 0
      %1049 = vmatprep.subr.bf16.mxu0 0
      %1050 = vmatpush1.bf16.msra.mxu0 0
      %1051 = vmatprep.subr.bf16.mxu0 0
      %1052 = vmatpush1.bf16.msra.mxu0 0
      %1053 = vmatprep.subr.bf16.mxu0 0
      %1054 = vmatpush1.bf16.msra.mxu0 0
      %1055 = vmatprep.subr.bf16.mxu0 0
      %1056 = vmatpush1.bf16.msra.mxu0 0
      %1057 = vmatprep.subr.bf16.mxu0 0
      %1058 = vmatpush1.bf16.msra.mxu0 0
      %1059 = vmatprep.subr.bf16.mxu0 0
      %1060 = vmatpush1.bf16.msra.mxu0 0
      %1061 = vmatprep.mubr.bf16.mxu0 0
      %1062 = vmatmul.mubr.bf16.gmra.mrb[0].mxu0 %v1018
      %v1063 = vpop.f32.mrb[0].mxu0
      %v1064 = vadd.f32 0.0, %v1063
      %v1065 = vpop.f32.mrb[0].mxu0
      %v1066 = vadd.f32 0.0, %v1065
      %v1067 = vpop.f32.mrb[0].mxu0
      %v1068 = vpop.f32.mrb[0].mxu0
      %1069 = vdwg.mxu0
      %1070 = vmatprep.subr.bf16.mxu0 0
      %1071 = vmatpush1.bf16.msra.mxu0 %v1027
      %1072 = vmatprep.subr.bf16.mxu0 0
      %1073 = vmatpush1.bf16.msra.mxu0 0
      %1074 = vmatprep.subr.bf16.mxu0 0
      %1075 = vmatpush1.bf16.msra.mxu0 0
      %1076 = vmatprep.subr.bf16.mxu0 0
      %1077 = vmatpush1.bf16.msra.mxu0 0
      %1078 = vmatprep.subr.bf16.mxu0 0
      %1079 = vmatpush1.bf16.msra.mxu0 0
      %1080 = vmatprep.subr.bf16.mxu0 0
      %1081 = vmatpush1.bf16.msra.mxu0 0
      %1082 = vmatprep.subr.bf16.mxu0 0
      %1083 = vmatpush1.bf16.msra.mxu0 0
      %1084 = vmatprep.subr.bf16.mxu0 0
      %1085 = vmatpush1.bf16.msra.mxu0 0
      %1086 = vmatprep.subr.bf16.mxu0 0
      %1087 = vmatpush1.bf16.msra.mxu0 0
      %1088 = vmatprep.subr.bf16.mxu0 0
      %1089 = vmatpush1.bf16.msra.mxu0 0
      %1090 = vmatprep.subr.bf16.mxu0 0
      %1091 = vmatpush1.bf16.msra.mxu0 0
      %1092 = vmatprep.subr.bf16.mxu0 0
      %1093 = vmatpush1.bf16.msra.mxu0 0
      %1094 = vmatprep.subr.bf16.mxu0 0
      %1095 = vmatpush1.bf16.msra.mxu0 0
      %1096 = vmatprep.subr.bf16.mxu0 0
      %1097 = vmatpush1.bf16.msra.mxu0 0
      %1098 = vmatprep.subr.bf16.mxu0 0
      %1099 = vmatpush1.bf16.msra.mxu0 0
      %1100 = vmatprep.subr.bf16.mxu0 0
      %1101 = vmatpush1.bf16.msra.mxu0 0
      %1102 = vmatprep.mubr.bf16.mxu0 0
      %1103 = vmatmul.mubr.bf16.gmra.mrb[0].mxu0 %v1018
      %v1104 = vpop.f32.mrb[0].mxu0
      %v1105 = vadd.f32 0.0, %v1104
      %v1106 = vpop.f32.mrb[0].mxu0
      %v1107 = vpop.f32.mrb[0].mxu0
      %v1108 = vpop.f32.mrb[0].mxu0
      %1109 = vdwg.mxu0
      %v1110 = vadd.f32 %v985, %v1064
      %v1111 = vadd.f32 %v986, %v1066
      %v1112 = vadd.f32 %v987, %v1105
      %v1113 = vld [vmem:[%s138] sm:$0x3f]
      %s1114 = scalar_lea.vmem %s0, 32
      %v1115 = vld [vmem:[%s1114] sm:$0xf]
      %v1117 = vcombine.high %v1113, %v1113
      %v1119 = vunpack.c.l.s4 1983009808
      %v1120 = vunpack.c.0.s8 %v1119
      %v1121 = vlaneseq
      %v1122 = vshrl.u32 %v1121, 7
      %v1123 = vsub.s32 %v1120, %v1122
      %v1124 = vrot.slane %v1113, %v1123
      %v1126 = vunpack.c.l.s4 1983009808
      %v1127 = vunpack.c.0.s8 %v1126
      %v1128 = vlaneseq
      %v1129 = vshrl.u32 %v1128, 7
      %v1130 = vsub.s32 %v1127, %v1129
      %v1131 = vrot.slane %v1117, %v1130
      %v1132 = vcombine.high %v1124, %v1124
      %1133 = vrot.lane.b32.xlu0 %v1124, 90
      %v1134 = vpop.permute.xlu0 %1133
      %1135 = vrot.lane.b32.xlu0 %v1132, 90
      %v1136 = vpop.permute.xlu0 %1135
      %1137 = vrot.lane.b32.xlu0 %v1131, 90
      %v1138 = vpop.permute.xlu0 %1137
      %vm1139 = vcmask 736256
      %v1140 = vsel %vm1139, %v1134, %v1136
      %v1141 = vsel %vm1139, %v1136, %v1138
      %v1143 = vsel %vm175, %v1115, 0
      %v1146 = vsel %vm179, %v1140, 0
      %v1149 = vsel %vm179, %v1141, 0
      %v1152 = vsel %vm179, %v1138, 0
      %1154 = vmatprep.subr.bf16.mxu0 %v1149
      %1155 = vmatpush1.bf16.msra.mxu0 %v1146
      %1156 = vmatprep.subr.bf16.mxu0 0
      %1157 = vmatpush1.bf16.msra.mxu0 0
      %1158 = vmatprep.subr.bf16.mxu0 0
      %1159 = vmatpush1.bf16.msra.mxu0 0
      %1160 = vmatprep.subr.bf16.mxu0 0
      %1161 = vmatpush1.bf16.msra.mxu0 0
      %1162 = vmatprep.subr.bf16.mxu0 0
      %1163 = vmatpush1.bf16.msra.mxu0 0
      %1164 = vmatprep.subr.bf16.mxu0 0
      %1165 = vmatpush1.bf16.msra.mxu0 0
      %1166 = vmatprep.subr.bf16.mxu0 0
      %1167 = vmatpush1.bf16.msra.mxu0 0
      %1168 = vmatprep.subr.bf16.mxu0 0
      %1169 = vmatpush1.bf16.msra.mxu0 0
      %1170 = vmatprep.subr.bf16.mxu0 0
      %1171 = vmatpush1.bf16.msra.mxu0 0
      %1172 = vmatprep.subr.bf16.mxu0 0
      %1173 = vmatpush1.bf16.msra.mxu0 0
      %1174 = vmatprep.subr.bf16.mxu0 0
      %1175 = vmatpush1.bf16.msra.mxu0 0
      %1176 = vmatprep.subr.bf16.mxu0 0
      %1177 = vmatpush1.bf16.msra.mxu0 0
      %1178 = vmatprep.subr.bf16.mxu0 0
      %1179 = vmatpush1.bf16.msra.mxu0 0
      %1180 = vmatprep.subr.bf16.mxu0 0
      %1181 = vmatpush1.bf16.msra.mxu0 0
      %1182 = vmatprep.subr.bf16.mxu0 0
      %1183 = vmatpush1.bf16.msra.mxu0 0
      %1184 = vmatprep.subr.bf16.mxu0 0
      %1185 = vmatpush1.bf16.msra.mxu0 0
      %1186 = vmatprep.mubr.bf16.mxu0 0
      %1187 = vmatmul.mubr.bf16.gmra.mrb[0].mxu0 %v1143
      %v1188 = vpop.f32.mrb[0].mxu0
      %v1189 = vadd.f32 0.0, %v1188
      %v1190 = vpop.f32.mrb[0].mxu0
      %v1191 = vadd.f32 0.0, %v1190
      %v1192 = vpop.f32.mrb[0].mxu0
      %v1193 = vpop.f32.mrb[0].mxu0
      %1194 = vdwg.mxu0
      %1195 = vmatprep.subr.bf16.mxu0 0
      %1196 = vmatpush1.bf16.msra.mxu0 %v1152
      %1197 = vmatprep.subr.bf16.mxu0 0
      %1198 = vmatpush1.bf16.msra.mxu0 0
      %1199 = vmatprep.subr.bf16.mxu0 0
      %1200 = vmatpush1.bf16.msra.mxu0 0
      %1201 = vmatprep.subr.bf16.mxu0 0
      %1202 = vmatpush1.bf16.msra.mxu0 0
      %1203 = vmatprep.subr.bf16.mxu0 0
      %1204 = vmatpush1.bf16.msra.mxu0 0
      %1205 = vmatprep.subr.bf16.mxu0 0
      %1206 = vmatpush1.bf16.msra.mxu0 0
      %1207 = vmatprep.subr.bf16.mxu0 0
      %1208 = vmatpush1.bf16.msra.mxu0 0
      %1209 = vmatprep.subr.bf16.mxu0 0
      %1210 = vmatpush1.bf16.msra.mxu0 0
      %1211 = vmatprep.subr.bf16.mxu0 0
      %1212 = vmatpush1.bf16.msra.mxu0 0
      %1213 = vmatprep.subr.bf16.mxu0 0
      %1214 = vmatpush1.bf16.msra.mxu0 0
      %1215 = vmatprep.subr.bf16.mxu0 0
      %1216 = vmatpush1.bf16.msra.mxu0 0
      %1217 = vmatprep.subr.bf16.mxu0 0
      %1218 = vmatpush1.bf16.msra.mxu0 0
      %1219 = vmatprep.subr.bf16.mxu0 0
      %1220 = vmatpush1.bf16.msra.mxu0 0
      %1221 = vmatprep.subr.bf16.mxu0 0
      %1222 = vmatpush1.bf16.msra.mxu0 0
      %1223 = vmatprep.subr.bf16.mxu0 0
      %1224 = vmatpush1.bf16.msra.mxu0 0
      %1225 = vmatprep.subr.bf16.mxu0 0
      %1226 = vmatpush1.bf16.msra.mxu0 0
      %1227 = vmatprep.mubr.bf16.mxu0 0
      %1228 = vmatmul.mubr.bf16.gmra.mrb[0].mxu0 %v1143
      %v1229 = vpop.f32.mrb[0].mxu0
      %v1230 = vadd.f32 0.0, %v1229
      %v1231 = vpop.f32.mrb[0].mxu0
      %v1232 = vpop.f32.mrb[0].mxu0
      %v1233 = vpop.f32.mrb[0].mxu0
      %1234 = vdwg.mxu0
      %v1235 = vadd.f32 %v1110, %v1189
      %v1236 = vadd.f32 %v1111, %v1191
      %v1237 = vadd.f32 %v1112, %v1230
      %1238 = vst [vmem:[%s143] sm:$0xff] %v1235
      %1239 = vst [vmem:[%s143 + $0x8] sm:$0xff] %v1236
      %vm1240 = vcmask 261120
      %1241 = vst.msk [vmem:[%s143 + $0x10] sm:$0xff] %vm1240, %v1237
      %p1242 = scmp.lt.s32.totalorder %s13, 1
      %s1243 = scalar_select %p1242, %s13, 1
      %s1244 = smul.addr %s1243, 3
      %s1245 = smul.addr %s1244, 8
      %s1246 = scalar_lea.vmem %s2, %s1245
      // Predicated region
      $region29: #{base_model_forward.1} parent=27 // pred_check
        %p1247 = pneg %p78
      $region30: #{base_model_forward.1} parent=27 // pred_check_branch
        %1249 = sbr.rel (%p1247) target = $region32
      $region31: #{base_model_forward.1} parent=27 // pred_region
        _
      $region32: #{base_model_forward.1} parent=27 // pred_fallthru
        _
    $region28: #{base_model_forward.1} parent=5 // pred_fallthru
      _
    %p1250 = scmp.le.s32.totalorder 2, %s8
    // Predicated region
    $region33: #{base_model_forward.1} parent=5 // pred_check
      %p1251 = pneg %p1250
    $region34: #{base_model_forward.1} parent=5 // pred_check_branch
      %1253 = sbr.rel (%p1251) target = $region36
    $region35: #{base_model_forward.1} parent=5 // pred_region
      %s1254 = ssub.s32 %s8, 2
      // Predicated region
      $region37: #{base_model_forward.1} parent=35 // pred_check
        %p1255 = pneg %p84
      $region38: #{base_model_forward.1} parent=35 // pred_check_branch
        %1257 = sbr.rel (%p1255) target = $region40
      $region39: #{base_model_forward.1} parent=35 // pred_region
        %p1258 = scmp.lt.s32.totalorder %s14, 1
        %s1259 = scalar_select %p1258, %s14, 1
        %s1260 = smul.addr %s1259, 3
        %s1261 = smul.addr %s1260, 8
        %s1262 = scalar_lea.vmem %s2, %s1261
      $region40: #{base_model_forward.1} parent=35 // pred_fallthru
        _
    $region36: #{base_model_forward.1} parent=5 // pred_fallthru
      _
  $region6: #{base_model_forward.1} parent=0 // loop_footer
    %s12 = sadd.s32 1, %s8
  $region7: #{base_model_forward.1} parent=0 // loop_footer_branch
    %7 = sbr.rel target = $region3
  $region8: #{base_model_forward.1} parent=0 // loop_exit
    _

</llo_original>
